<compile_context>
chip_gen: v5e
topology: v5e:2x2
jax: 0.10.0
libtpu: 0.0.40
codegen_flags: <defaults>
</compile_context>

<pallas_src>
from itertools import accumulate

import numpy as np
import jax
import jax.numpy as jnp
from jax.experimental import pallas as pl
from jax.experimental.pallas import tpu as pltpu


def _round_up(x, m):
    return (x + m - 1) // m * m


# ---------------------------------------------------------------------------
# Pallas kernel: one (group, out-tile) step = one small MXU matmul + bias add.
# ---------------------------------------------------------------------------
def _desync_group_kernel(x_ref, w_ref, b_ref, o_ref):
    """x_ref: (B_pad, Kg_pad) bf16; w_ref: (Kg_pad, tn) bf16;
    b_ref: (1, tn) f32; o_ref: (B_pad, tn) f32."""
    acc = jnp.dot(x_ref[...], w_ref[...], preferred_element_type=jnp.float32)
    o_ref[...] = (acc + b_ref[...]).astype(o_ref.dtype)


# ---------------------------------------------------------------------------
# One-time (init-time) construction of the per-group stacked operator.
# ---------------------------------------------------------------------------
def _convT_matrix_np(w, L_in, L_out, stride, padding):
    """T[g, (ci, t_in), t_out] = w[g, ci, k] where t_out == t_in*stride - padding + k."""
    C_s, c_sync, K = w.shape
    t_in = np.arange(L_in)[:, None, None]        # (L_in, 1, 1)
    k = np.arange(K)[None, :, None]              # (1,   K, 1)
    t_out = np.arange(L_out)[None, None, :]      # (1,   1, L_out)
    mask = (t_out == t_in * stride - padding + k).astype(w.dtype)  # (L_in, K, L_out)
    T = np.einsum("gck,lko->gclo", w, mask)      # (C_s, c_sync, L_in, L_out)
    return T.reshape(C_s, c_sync * L_in, L_out)


def build_desync_operator(sensors, num_channels, c_sync, L_common,
                          conv_params, weights, biases,
                          compute_dtype=jnp.bfloat16):
    """Precompute the stacked per-group conv-transpose operator.

    Returns a dict with:
      W:       (G_total, Kg_pad, L_pad) compute_dtype (bf16) — de-zeroed stack
      bias:    (G_total, 1, L_pad) f32
      out_meta: list of (sensor, C_s, L_out, group_offset) for output slicing
      plus shape metadata.
    """
    G_total = sum(num_channels[s] for s in sensors)
    Kg = c_sync * L_common
    Kg_pad = _round_up(Kg, 8)          # sublane-align W's contraction dim

    out_meta = []
    g_off = 0
    L_out_max = 0
    for s in sensors:
        C_s = num_channels[s]
        p = conv_params[s]
        L_out = (L_common - 1) * p["stride"] - 2 * p["padding"] + p["kernel_size"]
        out_meta.append((s, C_s, L_out, g_off))
        g_off += C_s
        L_out_max = max(L_out_max, L_out)
    L_pad = _round_up(L_out_max, 128)  # lane-dense, unmasked stores

    W_stack = np.zeros((G_total, Kg_pad, L_pad), np.float32)
    bias_stack = np.zeros((G_total, 1, L_pad), np.float32)
    for (s, C_s, L_out, goff) in out_meta:
        p = conv_params[s]
        w = np.asarray(weights[s], np.float32)   # (C_s, c_sync, K)
        b = np.asarray(biases[s], np.float32)    # (C_s,)
        T = _convT_matrix_np(w, L_common, L_out, p["stride"], p["padding"])
        W_stack[goff:goff + C_s, :Kg, :L_out] = T
        bias_stack[goff:goff + C_s, 0, :L_out] = b[:, None]

    return dict(
        W=jnp.asarray(W_stack, compute_dtype),
        bias=jnp.asarray(bias_stack, jnp.float32),
        out_meta=out_meta,
        G_total=G_total, c_sync=c_sync, L_common=L_common,
        Kg=Kg, Kg_pad=Kg_pad, L_pad=L_pad,
        compute_dtype=compute_dtype,
    )


# ---------------------------------------------------------------------------
# Forward pass: one pallas_call over a (group, out-tile) grid, then free
# wrapper-side slicing per sensor.
# ---------------------------------------------------------------------------
def desynchronization_block_forward(fused_output, op):
    """fused_output: (B, C_total*c_sync, L_common) -> list of (B, C_s, L_s)."""
    B, CT, L = fused_output.shape
    G, c_sync, L_common = op["G_total"], op["c_sync"], op["L_common"]
    Kg, Kg_pad, L_pad = op["Kg"], op["Kg_pad"], op["L_pad"]
    assert CT == G * c_sync and L == L_common

    # Group-major channel layout matches PyTorch's grouped ConvTranspose1d:
    # group g uses fused channels [g*c_sync:(g+1)*c_sync].
    x = fused_output.reshape(B, G, Kg).transpose(1, 0, 2)     # (G, B, Kg)
    B_pad = _round_up(max(B, 1), 8)                           # sublane-align batch
    x = jnp.pad(x, ((0, 0), (0, B_pad - B), (0, Kg_pad - Kg)))
    x = x.astype(op["compute_dtype"])

    # Output tile width: largest of 512/256/128 dividing L_pad (L_pad % 128 == 0).
    tn = 128
    for cand in (512, 256):
        if L_pad % cand == 0:
            tn = cand
            break
    grid = (G, L_pad // tn)

    out = pl.pallas_call(
        _desync_group_kernel,
        out_shape=jax.ShapeDtypeStruct((G, B_pad, L_pad), fused_output.dtype),
        grid_spec=pltpu.PrefetchScalarGridSpec(
            num_scalar_prefetch=0,
            grid=grid,
            in_specs=[
                # x block constant over the out-tile axis -> stays VMEM-resident.
                pl.BlockSpec((None, B_pad, Kg_pad), lambda g, n: (g, 0, 0)),
                pl.BlockSpec((None, Kg_pad, tn), lambda g, n: (g, 0, n)),
                pl.BlockSpec((None, 1, tn), lambda g, n: (g, 0, n)),
            ],
            out_specs=pl.BlockSpec((None, B_pad, tn), lambda g, n: (g, 0, n)),
        ),
        compiler_params=pltpu.CompilerParams(
            # Both axes independent; v7x's two TensorCores split the grid.
            dimension_semantics=("parallel", "parallel"),
            # Explicit scoped-VMEM ceiling: safe on v5e/v6e (128 MiB physical)
            # and v7x (64 MiB physical); blocks here are far smaller anyway.
            vmem_limit_bytes=32 * 1024 * 1024,
        ),
    )(x, op["W"], op["bias"])

    outs = []
    for (s, C_s, L_out, goff) in op["out_meta"]:
        outs.append(out[goff:goff + C_s, :B, :L_out].transpose(1, 0, 2))
    return outs


# ---------------------------------------------------------------------------
# Numpy reference (grouped ConvTranspose1d, groups = C_sensor).
# ---------------------------------------------------------------------------
def _ref_grouped_convT(x_s, w, b, stride, padding):
    x = np.asarray(x_s, np.float32)
    W = np.asarray(w, np.float32)
    bb = np.asarray(b, np.float32)
    B, _, L_in = x.shape
    C_s, c_sync, K = W.shape
    L_out = (L_in - 1) * stride - 2 * padding + K
    out = np.zeros((B, C_s, L_out), np.float32) + bb[None, :, None]
    for g in range(C_s):
        for ci in range(c_sync):
            for t in range(L_in):
                for k in range(K):
                    to = t * stride - padding + k
                    if 0 <= to < L_out:
                        out[:, g, to] += x[:, g * c_sync + ci, t] * W[g, ci, k]
    return out


if __name__ == "__main__":
    key = jax.random.PRNGKey(0)

    sensors = ["imu", "ppg"]
    num_channels = {"imu": 3, "ppg": 2}
    c_sync = 2
    L_common = 16
    B = 2
    total_ch = sum(num_channels.values()) * c_sync   # 10

    # synthetic "inverted synchronization head" (ConvTranspose1d) hyperparameters
    conv_params = {
        "imu": dict(kernel_size=4, stride=2, padding=1),   # L_sensor = 32
        "ppg": dict(kernel_size=8, stride=4, padding=2),   # L_sensor = 64
    }

    # deterministic parameter init (grouped conv-transpose weights + bias per sensor)
    weights, biases = {}, {}
    for i, s in enumerate(sensors):
        C_s = num_channels[s]
        K = conv_params[s]["kernel_size"]
        ks = jax.random.fold_in(key, i)
        kw, kb = jax.random.split(ks)
        weights[s] = 0.1 * jax.random.normal(kw, (C_s, c_sync, K), jnp.float32)
        biases[s] = 0.1 * jax.random.normal(kb, (C_s,), jnp.float32)

    k_in, _ = jax.random.split(key)
    fused_output = jax.random.normal(k_in, (B, total_ch, L_common), jnp.float32)

    # init-time: build the de-zeroed per-group stacked operator once (bf16)
    desync_op = build_desync_operator(
        sensors, num_channels, c_sync, L_common, conv_params, weights, biases,
        compute_dtype=jnp.bfloat16)

    outs = desynchronization_block_forward(fused_output, desync_op)
    outs = jax.block_until_ready(outs)

    # correctness check against a plain numpy grouped conv-transpose reference
    # (looser tolerance: bf16 operands, f32 accumulation)
    channel_sizes = [num_channels[s] * c_sync for s in sensors]
    offsets = [0] + list(accumulate(channel_sizes))[:-1]
    for i, s in enumerate(sensors):
        sl = slice(offsets[i], offsets[i] + channel_sizes[i])
        ref = _ref_grouped_convT(fused_output[:, sl, :], weights[s], biases[s],
                                 conv_params[s]["stride"], conv_params[s]["padding"])
        np.testing.assert_allclose(np.asarray(outs[i], np.float32), ref,
                                   rtol=2e-2, atol=2e-2)

    print("KERNEL_OK")
</pallas_src>

<mosaic_0001>
module attributes {stable_mosaic.version = 11 : i64} {
  func.func @_desync_group_kernel(%arg0: i32, %arg1: i32, %arg2: memref<1x8x32xbf16, #tpu.memory_space<vmem>>, %arg3: memref<1x32x128xbf16, #tpu.memory_space<vmem>>, %arg4: memref<1x1x128xf32, #tpu.memory_space<vmem>>, %arg5: memref<1x8x128xf32, #tpu.memory_space<vmem>>) attributes {dimension_semantics = [#tpu.dimension_semantics<parallel>, #tpu.dimension_semantics<parallel>], iteration_bounds = array<i64: 5, 1>, scalar_prefetch = 0 : i64, scratch_operands = 0 : i64, tpu.core_type = #tpu.core_type<tc>, window_params = [{transform_indices = @transform_0, window_bounds = array<i64: 1, 8, 32>}, {transform_indices = @transform_1, window_bounds = array<i64: 1, 32, 128>}, {transform_indices = @transform_2, window_bounds = array<i64: 1, 1, 128>}, {transform_indices = @transform_3, window_bounds = array<i64: 1, 8, 128>}]} {
    %c0 = arith.constant 0 : index
    %c0_0 = arith.constant 0 : index
    %c0_1 = arith.constant 0 : index
    %0 = vector.load %arg2[%c0, %c0_0, %c0_1] : memref<1x8x32xbf16, #tpu.memory_space<vmem>>, vector<1x8x32xbf16>
    %1 = vector.shape_cast %0 : vector<1x8x32xbf16> to vector<8x32xbf16>
    %c0_2 = arith.constant 0 : index
    %c0_3 = arith.constant 0 : index
    %c0_4 = arith.constant 0 : index
    %2 = vector.load %arg3[%c0_2, %c0_3, %c0_4] : memref<1x32x128xbf16, #tpu.memory_space<vmem>>, vector<1x32x128xbf16>
    %3 = vector.shape_cast %2 : vector<1x32x128xbf16> to vector<32x128xbf16>
    %cst = arith.constant dense<0.000000e+00> : vector<8x128xf32>
    %4 = tpu.matmul %1, %3, %cst {dimension_numbers = #tpu.dot_dimension_numbers<[1], [0], [0], [1], [0, 0, 1, 1], [], []>} : vector<8x32xbf16>, vector<32x128xbf16>, vector<8x128xf32> -> vector<8x128xf32>
    %c0_5 = arith.constant 0 : index
    %c0_6 = arith.constant 0 : index
    %c0_7 = arith.constant 0 : index
    %5 = vector.load %arg4[%c0_5, %c0_6, %c0_7] : memref<1x1x128xf32, #tpu.memory_space<vmem>>, vector<1x1x128xf32>
    %6 = vector.shape_cast %5 : vector<1x1x128xf32> to vector<1x128xf32>
    %7 = vector.broadcast %6 : vector<1x128xf32> to vector<8x128xf32>
    %8 = arith.addf %4, %7 : vector<8x128xf32>
    %c0_8 = arith.constant 0 : index
    %c0_9 = arith.constant 0 : index
    %c0_10 = arith.constant 0 : index
    %9 = vector.load %arg5[%c0_8, %c0_9, %c0_10] : memref<1x8x128xf32, #tpu.memory_space<vmem>>, vector<1x8x128xf32>
    %10 = vector.shape_cast %9 : vector<1x8x128xf32> to vector<8x128xf32>
    %11 = vector.shape_cast %8 : vector<8x128xf32> to vector<1x8x128xf32>
    tpu.vector_store %arg5[%c0_8, %c0_9, %c0_10], %11 {strides = array<i32>} : memref<1x8x128xf32, #tpu.memory_space<vmem>>, vector<1x8x128xf32>,
    return
  }
  func.func @transform_0(%arg0: i32, %arg1: i32) -> (i32, i32, i32) {
    %c0_i32 = arith.constant 0 : i32
    %c0_i32_0 = arith.constant 0 : i32
    %c0_i32_1 = arith.constant 0 : i32
    return %arg0, %c0_i32, %c0_i32_0 : i32, i32, i32
  }
  func.func @transform_1(%arg0: i32, %arg1: i32) -> (i32, i32, i32) {
    %c0_i32 = arith.constant 0 : i32
    %c0_i32_0 = arith.constant 0 : i32
    return %arg0, %c0_i32, %arg1 : i32, i32, i32
  }
  func.func @transform_2(%arg0: i32, %arg1: i32) -> (i32, i32, i32) {
    %c0_i32 = arith.constant 0 : i32
    %c0_i32_0 = arith.constant 0 : i32
    return %arg0, %c0_i32, %arg1 : i32, i32, i32
  }
  func.func @transform_3(%arg0: i32, %arg1: i32) -> (i32, i32, i32) {
    %c0_i32 = arith.constant 0 : i32
    %c0_i32_0 = arith.constant 0 : i32
    return %arg0, %c0_i32, %arg1 : i32, i32, i32
  }
}

</mosaic_0001>

<llo_original>
// kernel: tpu_custom_call.1
$region0: #{tpu_custom_call.1}
  #allocation0 [shape = 'u32[]', space=smem, size = 0x4, offset = 0x4, fixed_abs, tag = 'smem constant byte address 0x4 - core index']
  #allocation1 [shape = 'u32[72,128]{1,0:T(1,128)}', space=vmem, size = 0x9000, scoped, tag = 'internal scratch']
  %s0 = inlined_call_operand.hbm [shape: bf16[5,8,32], index: 0, kind: input, shape index: {}]
  %s1 = inlined_call_operand.hbm [shape: bf16[5,32,128], index: 1, kind: input, shape index: {}]
  %s2 = inlined_call_operand.hbm [shape: f32[5,1,128], index: 2, kind: input, shape index: {}]
  %s3 = inlined_call_operand.hbm [shape: f32[5,8,128], index: 3, kind: output, shape index: {}]
  %s4 = sld [smem:[#allocation0]]
  $region57: #{tpu_custom_call.1} parent=0
    _
  %s6 = ssub.s32 1, %s4
  %s7 = scalar_select 0, %s6, %s4
  $region1: #{tpu_custom_call.1} parent=0
    #allocation2 [shape = 'u8[4096]{0}', space=vmem, size = 0x1000, scoped, tag = 'input window, operand 0']
    #allocation3 [shape = 's32[2]{0}', space=sflag, size = 0x8, scoped, tag = 'scoped memory for tpu_custom_call.1']
    #allocation4 [shape = 's32[2]{0}', space=sflag, size = 0x8, scoped, tag = 'scoped memory for tpu_custom_call.1']
    #allocation5 [shape = 'u8[16384]{0}', space=vmem, size = 0x4000, scoped, tag = 'input window, operand 1']
    #allocation6 [shape = 's32[2]{0}', space=sflag, size = 0x8, scoped, tag = 'scoped memory for tpu_custom_call.1']
    #allocation7 [shape = 'u8[1024]{0}', space=vmem, size = 0x400, scoped, tag = 'input window, operand 2']
    #allocation8 [shape = 'u8[8192]{0}', space=vmem, size = 0x2000, scoped, tag = 'output window, operand 0']
    %8 = vsyncpa [#allocation3], 0
    %s9 = scalar_lea.sflag [#allocation3], 1
    %10 = vsyncpa %s9, 0
    %11 = vsyncpa [#allocation6], 0
    %s12 = scalar_lea.sflag [#allocation6], 1
    %13 = vsyncpa %s12, 0
    %14 = vsyncpa [#allocation4], 0
    %s15 = scalar_lea.sflag [#allocation4], 1
    %16 = vsyncpa %s15, 0
    loop: start=0, step=1, limit=7
    $region2: #{tpu_custom_call.1} parent=1 // loop_pre_header
      _
    $region3: #{tpu_custom_call.1} parent=1 // loop_header
      %s18 = sphi 0, %s22
      %p19 = scmp.ge.s32.totalorder %s18, 7
      %s25 = sphi 0, %s37
      %s26 = sphi 0, %s33
      %s27 = sphi 0, %s25
      %s28 = sphi 0, %s26
      %s29 = sphi 0, %s27
      %s30 = sphi 0, %s28
      %s40 = sphi 0, %s42
      %s43 = sphi 0, %s40
      %s44 = sphi 0, %s43
      %s60 = sphi 0, %s44
      %s68 = sphi 0, %s70
      %s71 = sphi 0, %s68
      %s72 = sphi 0, %s71
      %s88 = sphi 0, %s72
      %s96 = sphi 0, %s98
      %s99 = sphi 0, %s96
      %s100 = sphi 0, %s99
      %s116 = sphi 0, %s100
      %s124 = sphi 0, %s126
      %s127 = sphi 0, %s124
      %s128 = sphi 0, %s127
      %s144 = sphi 0, %s128
    $region4: #{tpu_custom_call.1} parent=1 // loop_header_branch
      %21 = sbr.rel (%p19) target = $region8
    $region5: #{tpu_custom_call.1} parent=1 // loop_body
      %s23 = ssub.s32 %s18, 1
      %s24 = ssub.s32 %s18, 2
      %s31 = sadd.s32 1, %s26
      %p32 = scmp.ge.s32.totalorder %s31, 1
      %s33 = scalar_select %p32, 0, %s31
      %s34 = sadd.s32 1, %s25
      %s35 = scalar_select %p32, %s34, %s25
      %p36 = scmp.ge.s32.totalorder %s35, 5
      %s37 = scalar_select %p36, 0, %s35
      %s38 = ssub.s32 %s25, %s37
      %p39 = scmp.eq.s32.totalorder %s38, 0
      %s41 = sadd.s32 %s40, 1
      %s42 = scalar_select %p39, %s40, %s41
      %p45 = pneg %p39
      %p46 = scmp.eq.s32.totalorder %s18, 4
      %p47 = por %p45, %p46
      %p48 = scmp.ne.s32.totalorder %s40, %s43
      %p49 = scmp.eq.s32.totalorder %s18, 0
      %p50 = por %p48, %p49
      %p51 = scmp.ne.s32.totalorder %s40, %s43
      %p52 = scmp.eq.s32.totalorder %s23, 4
      %p53 = por %p51, %p52
      %p54 = scmp.ne.s32.totalorder %s43, %s44
      %p55 = scmp.eq.s32.totalorder %s23, 0
      %p56 = por %p54, %p55
      %p57 = scmp.ne.s32.totalorder %s43, %s44
      %p58 = scmp.eq.s32.totalorder %s24, 4
      %p59 = por %p57, %p58
      %p61 = scmp.ne.s32.totalorder %s44, %s60
      %p62 = scmp.eq.s32.totalorder %s24, 0
      %p63 = por %p61, %p62
      %s64 = ssub.s32 %s25, %s37
      %s65 = ssub.s32 %s26, %s33
      %s66 = sor.u32 %s64, %s65
      %p67 = scmp.eq.s32.totalorder %s66, 0
      %s69 = sadd.s32 %s68, 1
      %s70 = scalar_select %p67, %s68, %s69
      %p73 = pneg %p67
      %p74 = scmp.eq.s32.totalorder %s18, 4
      %p75 = por %p73, %p74
      %p76 = scmp.ne.s32.totalorder %s68, %s71
      %p77 = scmp.eq.s32.totalorder %s18, 0
      %p78 = por %p76, %p77
      %p79 = scmp.ne.s32.totalorder %s68, %s71
      %p80 = scmp.eq.s32.totalorder %s23, 4
      %p81 = por %p79, %p80
      %p82 = scmp.ne.s32.totalorder %s71, %s72
      %p83 = scmp.eq.s32.totalorder %s23, 0
      %p84 = por %p82, %p83
      %p85 = scmp.ne.s32.totalorder %s71, %s72
      %p86 = scmp.eq.s32.totalorder %s24, 4
      %p87 = por %p85, %p86
      %p89 = scmp.ne.s32.totalorder %s72, %s88
      %p90 = scmp.eq.s32.totalorder %s24, 0
      %p91 = por %p89, %p90
      %s92 = ssub.s32 %s25, %s37
      %s93 = ssub.s32 %s26, %s33
      %s94 = sor.u32 %s92, %s93
      %p95 = scmp.eq.s32.totalorder %s94, 0
      %s97 = sadd.s32 %s96, 1
      %s98 = scalar_select %p95, %s96, %s97
      %p101 = pneg %p95
      %p102 = scmp.eq.s32.totalorder %s18, 4
      %p103 = por %p101, %p102
      %p104 = scmp.ne.s32.totalorder %s96, %s99
      %p105 = scmp.eq.s32.totalorder %s18, 0
      %p106 = por %p104, %p105
      %p107 = scmp.ne.s32.totalorder %s96, %s99
      %p108 = scmp.eq.s32.totalorder %s23, 4
      %p109 = por %p107, %p108
      %p110 = scmp.ne.s32.totalorder %s99, %s100
      %p111 = scmp.eq.s32.totalorder %s23, 0
      %p112 = por %p110, %p111
      %p113 = scmp.ne.s32.totalorder %s99, %s100
      %p114 = scmp.eq.s32.totalorder %s24, 4
      %p115 = por %p113, %p114
      %p117 = scmp.ne.s32.totalorder %s100, %s116
      %p118 = scmp.eq.s32.totalorder %s24, 0
      %p119 = por %p117, %p118
      %s120 = ssub.s32 %s25, %s37
      %s121 = ssub.s32 %s26, %s33
      %s122 = sor.u32 %s120, %s121
      %p123 = scmp.eq.s32.totalorder %s122, 0
      %s125 = sadd.s32 %s124, 1
      %s126 = scalar_select %p123, %s124, %s125
      %p129 = pneg %p123
      %p130 = scmp.eq.s32.totalorder %s18, 4
      %p131 = por %p129, %p130
      %p132 = scmp.ne.s32.totalorder %s124, %s127
      %p133 = scmp.eq.s32.totalorder %s18, 0
      %p134 = por %p132, %p133
      %p135 = scmp.ne.s32.totalorder %s124, %s127
      %p136 = scmp.eq.s32.totalorder %s23, 4
      %p137 = por %p135, %p136
      %p138 = scmp.ne.s32.totalorder %s127, %s128
      %p139 = scmp.eq.s32.totalorder %s23, 0
      %p140 = por %p138, %p139
      %p141 = scmp.ne.s32.totalorder %s127, %s128
      %p142 = scmp.eq.s32.totalorder %s24, 4
      %p143 = por %p141, %p142
      %p145 = scmp.ne.s32.totalorder %s128, %s144
      %p146 = scmp.eq.s32.totalorder %s24, 0
      %p147 = por %p145, %p146
      %p148 = scmp.le.s32.totalorder 1, %s18
      %p149 = scmp.lt.s32.totalorder %s18, 6
      %p150 = pnand %p148, %p149
      %p151 = pneg %p150
      // Predicated region
      $region9: #{tpu_custom_call.1} parent=5 // pred_check
        _
      $region10: #{tpu_custom_call.1} parent=5 // pred_check_branch
        %153 = sbr.rel (%p150) target = $region12
      $region11: #{tpu_custom_call.1} parent=5 // pred_region
        %s154 = ssub.s32 %s18, 1
      $region12: #{tpu_custom_call.1} parent=5 // pred_fallthru
        _
      %p155 = scmp.lt.s32.totalorder %s18, 5
      // Predicated region
      $region13: #{tpu_custom_call.1} parent=5 // pred_check
        %p156 = pneg %p155
      $region14: #{tpu_custom_call.1} parent=5 // pred_check_branch
        %158 = sbr.rel (%p156) target = $region16
      $region15: #{tpu_custom_call.1} parent=5 // pred_region
        // Predicated region
        $region17: #{tpu_custom_call.1} parent=15 // pred_check
          %p159 = pneg %p50
        $region18: #{tpu_custom_call.1} parent=15 // pred_check_branch
          %161 = sbr.rel (%p159) target = $region20
        $region19: #{tpu_custom_call.1} parent=15 // pred_region
          %s162 = sand.u32 %s40, 1
          %s163 = scalar_lea.sflag [#allocation3], %s162
          %s164 = sand.u32 %s40, 1
          %s165 = smul.addr %s164, 4
          %s166 = scalar_lea.vmem [#allocation2], %s165
          %168 = vsyncadd %s163, 0
          %s169 = smul.addr %s25, 4
          %s170 = scalar_lea.hbm %s0, %s169
          %s172 = sshll.u32 %s170, 4
          %s173 = int_to_ptr.hbm [resolvable:$true] %s172
          %s174 = sshll.u32 %s166, 4
          %s175 = int_to_ptr.vmem [resolvable:$true] %s174
          %177 = dma.hbm_to_vmem [thread:$0]  %s173, 64, %s175, %s163
        $region20: #{tpu_custom_call.1} parent=15 // pred_fallthru
          _
        // Predicated region
        $region21: #{tpu_custom_call.1} parent=15 // pred_check
          %p178 = pneg %p78
        $region22: #{tpu_custom_call.1} parent=15 // pred_check_branch
          %180 = sbr.rel (%p178) target = $region24
        $region23: #{tpu_custom_call.1} parent=15 // pred_region
          %s181 = sand.u32 %s18, 1
          %s182 = scalar_lea.sflag [#allocation6], %s181
          %s183 = sand.u32 %s68, 1
          %s184 = smul.addr %s183, 16
          %s185 = scalar_lea.vmem [#allocation5], %s184
          %187 = vsyncadd %s182, 0
          %s188 = smul.addr %s25, 4
          %s189 = sadd.s32 %s26, %s188
          %s190 = smul.addr %s189, 4
          %s191 = scalar_lea.hbm %s1, %s190
          %s192 = sshll.u32 %s191, 4
          %s193 = int_to_ptr.hbm [resolvable:$true] %s192
          %s194 = sshll.u32 %s185, 4
          %s195 = int_to_ptr.vmem [resolvable:$true] %s194
          %200 = dma.hbm_to_vmem [thread:$0]  %s193, 256, %s195, %s182, 64, 64, 4
        $region24: #{tpu_custom_call.1} parent=15 // pred_fallthru
          _
        // Predicated region
        $region25: #{tpu_custom_call.1} parent=15 // pred_check
          %p201 = pneg %p106
        $region26: #{tpu_custom_call.1} parent=15 // pred_check_branch
          %203 = sbr.rel (%p201) target = $region28
        $region27: #{tpu_custom_call.1} parent=15 // pred_region
          %s204 = sand.u32 %s18, 1
          %s205 = scalar_lea.sflag [#allocation6], %s204
          %s206 = sand.u32 %s96, 1
          %s207 = scalar_lea.vmem [#allocation7], %s206
          %209 = vsyncadd %s205, 0
          %s210 = sadd.s32 %s26, %s25
          %s211 = scalar_lea.hbm %s2, %s210
          %s213 = sshll.u32 %s211, 4
          %s214 = int_to_ptr.hbm [resolvable:$true] %s213
          %s215 = sshll.u32 %s207, 4
          %s216 = int_to_ptr.vmem [resolvable:$true] %s215
          %218 = dma.hbm_to_vmem [thread:$0]  %s214, 16, %s216, %s205
        $region28: #{tpu_custom_call.1} parent=15 // pred_fallthru
          _
      $region16: #{tpu_custom_call.1} parent=5 // pred_fallthru
        _
      %p219 = scmp.le.s32.totalorder 1, %s18
      %p220 = scmp.lt.s32.totalorder %s18, 6
      %p221 = pnand %p219, %p220
      %p222 = pneg %p221
      // Predicated region
      $region29: #{tpu_custom_call.1} parent=5 // pred_check
        _
      $region30: #{tpu_custom_call.1} parent=5 // pred_check_branch
        %224 = sbr.rel (%p221) target = $region32
      $region31: #{tpu_custom_call.1} parent=5 // pred_region
        %s225 = ssub.s32 %s18, 1
        %s226 = sand.u32 %s43, 1
        %s227 = scalar_lea.sflag [#allocation3], %s226
        %s228 = sand.u32 %s43, 1
        %s229 = smul.addr %s228, 4
        %s230 = scalar_lea.vmem [#allocation2], %s229
        // Predicated region
        $region33: #{tpu_custom_call.1} parent=31 // pred_check
          %p231 = pneg %p56
        $region34: #{tpu_custom_call.1} parent=31 // pred_check_branch
          %233 = sbr.rel (%p231) target = $region36
        $region35: #{tpu_custom_call.1} parent=31 // pred_region
          %235 = dma.done %s227, 64
        $region36: #{tpu_custom_call.1} parent=31 // pred_fallthru
          _
        %s236 = sand.u32 %s23, 1
        %s237 = scalar_lea.sflag [#allocation6], %s236
        %s238 = sand.u32 %s71, 1
        %s239 = smul.addr %s238, 16
        %s240 = scalar_lea.vmem [#allocation5], %s239
        // Predicated region
        $region37: #{tpu_custom_call.1} parent=31 // pred_check
          %p241 = pneg %p84
        $region38: #{tpu_custom_call.1} parent=31 // pred_check_branch
          %243 = sbr.rel (%p241) target = $region40
        $region39: #{tpu_custom_call.1} parent=31 // pred_region
          %245 = dma.done %s237, 256
        $region40: #{tpu_custom_call.1} parent=31 // pred_fallthru
          _
        %s246 = sand.u32 %s23, 1
        %s247 = scalar_lea.sflag [#allocation6], %s246
        %s248 = sand.u32 %s99, 1
        %s249 = scalar_lea.vmem [#allocation7], %s248
        // Predicated region
        $region41: #{tpu_custom_call.1} parent=31 // pred_check
          %p250 = pneg %p112
        $region42: #{tpu_custom_call.1} parent=31 // pred_check_branch
          %252 = sbr.rel (%p250) target = $region44
        $region43: #{tpu_custom_call.1} parent=31 // pred_region
          %254 = dma.done %s247, 16
        $region44: #{tpu_custom_call.1} parent=31 // pred_fallthru
          _
        %s255 = sand.u32 %s43, 1
        %s256 = scalar_lea.sflag [#allocation3], %s255
        %s257 = sand.u32 %s43, 1
        %s258 = smul.addr %s257, 4
        %s259 = scalar_lea.vmem [#allocation2], %s258
        %p260 = pneg %p56
        %p261 = pneg %p53
        %s262 = sand.u32 %s23, 1
        %s263 = scalar_lea.sflag [#allocation6], %s262
        %s264 = sand.u32 %s71, 1
        %s265 = smul.addr %s264, 16
        %s266 = scalar_lea.vmem [#allocation5], %s265
        %p267 = pneg %p84
        %p268 = pneg %p81
        %s269 = sand.u32 %s23, 1
        %s270 = scalar_lea.sflag [#allocation6], %s269
        %s271 = sand.u32 %s99, 1
        %s272 = scalar_lea.vmem [#allocation7], %s271
        %p273 = pneg %p112
        %p274 = pneg %p109
        %p275 = pneg %p140
        %p276 = pneg %p137
        %s277 = sand.u32 %s127, 1
        %s278 = scalar_lea.sflag [#allocation4], %s277
        %s279 = sand.u32 %s127, 1
        %s280 = smul.addr %s279, 8
        %s281 = scalar_lea.vmem [#allocation8], %s280
        %v283 = vld [vmem:[%s230] sm:$0xf]
        %v284 = vld [vmem:[%s240] sm:$0xf]
        %v285 = vld [vmem:[%s240 + $0x4] sm:$0xf]
        %v286 = vld [vmem:[%s240 + $0x8] sm:$0xf]
        %v287 = vld [vmem:[%s240 + $0xc] sm:$0xf]
        %v288 = vld [vmem:[%s249] sm:$0x1]
        %v290 = vperm.slane %v288, 0
        %v296 = vunpack.c.l.b16 %v284
        %v297 = vunpack.c.l.b16 %v285
        %v298 = vunpack.c.l.b16 %v286
        %v299 = vunpack.c.l.b16 %v287
        %v300 = vpack.c.b16 %v297, %v296
        %v301 = vpack.c.b16 %v299, %v298
        %vm304 = vcmask 261120
        %v306 = vsel %vm304, %v283, 0
        %308 = vmatpush.bf16.msra.mxu0 0
        %309 = vmatpush.bf16.msra.mxu0 0
        %310 = vmatpush.bf16.msra.mxu0 0
        %311 = vmatpush.bf16.msra.mxu0 0
        %312 = vmatpush.bf16.msra.mxu0 0
        %313 = vmatpush.bf16.msra.mxu0 0
        %314 = vmatpush.bf16.msra.mxu0 %v301
        %315 = vmatpush.bf16.msra.mxu0 %v300
        %316 = vmatmul.bf16.gmra.mxu0 %v306
        %v317 = vpop.f32.mrf.mxu0
        %v318 = vadd.f32 %v290, %v317
        %v319 = vpop.f32.mrf.mxu0
        %320 = vdwg.mxu0
        %321 = vst [vmem:[%s281] sm:$0xff] %v318
        %s322 = sand.u32 %s127, 1
        %s323 = scalar_lea.sflag [#allocation4], %s322
        %s324 = sand.u32 %s127, 1
        %s325 = smul.addr %s324, 8
        %s326 = scalar_lea.vmem [#allocation8], %s325
        // Predicated region
        $region45: #{tpu_custom_call.1} parent=31 // pred_check
          %p327 = pneg %p137
        $region46: #{tpu_custom_call.1} parent=31 // pred_check_branch
          %329 = sbr.rel (%p327) target = $region48
        $region47: #{tpu_custom_call.1} parent=31 // pred_region
          %331 = vsyncadd %s323, 0
          %s332 = sadd.s32 %s28, %s27
          %s333 = smul.addr %s332, 8
          %s334 = scalar_lea.hbm %s3, %s333
          %s336 = sshll.u32 %s326, 4
          %s337 = int_to_ptr.vmem [resolvable:$true] %s336
          %s338 = sshll.u32 %s334, 4
          %s339 = int_to_ptr.hbm [resolvable:$true] %s338
          %341 = dma.vmem_to_hbm [thread:$0]  %s337, 128, %s339, %s323
        $region48: #{tpu_custom_call.1} parent=31 // pred_fallthru
          _
      $region32: #{tpu_custom_call.1} parent=5 // pred_fallthru
        _
      %p342 = scmp.le.s32.totalorder 2, %s18
      // Predicated region
      $region49: #{tpu_custom_call.1} parent=5 // pred_check
        %p343 = pneg %p342
      $region50: #{tpu_custom_call.1} parent=5 // pred_check_branch
        %345 = sbr.rel (%p343) target = $region52
      $region51: #{tpu_custom_call.1} parent=5 // pred_region
        %s346 = ssub.s32 %s18, 2
        // Predicated region
        $region53: #{tpu_custom_call.1} parent=51 // pred_check
          %p347 = pneg %p143
        $region54: #{tpu_custom_call.1} parent=51 // pred_check_branch
          %349 = sbr.rel (%p347) target = $region56
        $region55: #{tpu_custom_call.1} parent=51 // pred_region
          %s350 = sand.u32 %s128, 1
          %s351 = scalar_lea.sflag [#allocation4], %s350
          %s352 = sand.u32 %s128, 1
          %s353 = smul.addr %s352, 8
          %s354 = scalar_lea.vmem [#allocation8], %s353
          %356 = dma.done %s351, 128
        $region56: #{tpu_custom_call.1} parent=51 // pred_fallthru
          _
      $region52: #{tpu_custom_call.1} parent=5 // pred_fallthru
        _
    $region6: #{tpu_custom_call.1} parent=1 // loop_footer
      %s22 = sadd.s32 1, %s18
    $region7: #{tpu_custom_call.1} parent=1 // loop_footer_branch
      %17 = sbr.rel target = $region3
    $region8: #{tpu_custom_call.1} parent=1 // loop_exit
      _
    %357 = vsyncpa [#allocation3], 1
    %s358 = scalar_lea.sflag [#allocation3], 1
    %359 = vsyncpa %s358, 1
    %360 = vsyncpa [#allocation6], 1
    %s361 = scalar_lea.sflag [#allocation6], 1
    %362 = vsyncpa %s361, 1
    %363 = vsyncpa [#allocation4], 1
    %s364 = scalar_lea.sflag [#allocation4], 1
    %365 = vsyncpa %s364, 1

</llo_original>
